<compile_context>
chip_gen: v5e
topology: v5e:2x2
jax: 0.10.0
libtpu: 0.0.40
codegen_flags: <defaults>
</compile_context>

<pallas_src>
import functools

import jax
import jax.numpy as jnp
from jax.experimental import pallas as pl
from jax.experimental.pallas import tpu as pltpu


def _round_up(v, m):
    return ((v + m - 1) // m) * m


def _round_down(v, m):
    return (v // m) * m


def _default_vmem_limit_bytes():
    """Generation-aware scoped-VMEM limit.

    v5e/v6e have 128 MiB physical VMEM per core (default scoped limit is only
    16/32 MiB); v7x has 64 MiB.  Use ~70% of physical, capped at 96 MiB, so
    the larger streaming blocks below fit on every generation with headroom.
    """
    cap = None
    try:
        cap = getattr(pltpu.get_tpu_info(), "vmem_capacity_bytes", None)
    except Exception:
        cap = None
    if not cap:
        cap = 64 * 1024 * 1024          # conservative floor (v7x)
    return int(min(cap * 7 // 10, 96 * 1024 * 1024))


def _choose_tiles(n_rows, t, itemsize, block_target_bytes):
    """Pick (row_tile, time_tile) so one block is ~block_target_bytes.

    Time (the contiguous, lane-dense axis) is maximized first; rows fill the
    remaining budget in multiples of 8 sublanes.  Row/time blocks may overhang
    the array (ragged edges); rows are independent so that is harmless.
    """
    elems = max(block_target_bytes // itemsize, 8 * 128)
    t_full = _round_up(t, 128)
    tt = min(t_full, max(128, _round_down(elems // 8, 128)))
    r_budget = max(8, _round_down(elems // tt, 8))
    if n_rows % 8 == 0:
        r_tile = min(n_rows, r_budget)
    elif n_rows <= r_budget:
        r_tile = n_rows                 # full (non-multiple-of-8) row dim in one block
    else:
        r_tile = r_budget               # ragged last row block; rows independent
    return r_tile, tt


# ---------------------------------------------------------------------------
# Kernels
# ---------------------------------------------------------------------------

def _fms_fused_kernel(x_ref, wt_ref, b_ref, o_ref, *, inv_t):
    """Fused single pass over one batch's (F, T) slab, resident in VMEM:
    sum -> mean -> linear -> sigmoid -> (x + 1) * s."""
    xf = x_ref[...].astype(jnp.float32)                   # (1, F, T)
    mean = jnp.sum(xf, axis=-1) * inv_t                   # (1, F)
    z = jnp.dot(mean, wt_ref[...],
                preferred_element_type=jnp.float32) + b_ref[...]
    s = jax.nn.sigmoid(z)[:, :, None]                     # (1, F, 1)
    o_ref[...] = ((xf + 1.0) * s).astype(o_ref.dtype)     # == x*s + s


def _fms_row_sum_kernel(x_ref, sum_ref, acc_ref, *, tt, t_valid, need_mask):
    """Pass 1 (two-pass path): per-row sums over time.

    Grid is (row_tiles, time_tiles) with time last ("arbitrary"); acc_ref is a
    per-row f32 accumulator living across the time tiles.  Only the last
    (ragged) time tile pays for lane masking — the garbage lanes of the
    partial block MUST be zeroed before summing; every other step is a pure
    stream + VALU-tree reduce that hides under the DMA.
    """
    t = pl.program_id(1)
    last = pl.num_programs(1) - 1

    @pl.when(t == 0)
    def _init():
        acc_ref[...] = jnp.zeros_like(acc_ref)

    def _accumulate(lane_limit=None):
        xf = x_ref[...].astype(jnp.float32)               # (r_tile, tt)
        if lane_limit is not None:
            lane = jax.lax.broadcasted_iota(jnp.int32, xf.shape, 1)
            xf = jnp.where(lane < lane_limit, xf, 0.0)    # zero OOB garbage
        acc_ref[...] += jnp.sum(xf, axis=-1, keepdims=True)

    if need_mask:
        @pl.when(t != last)
        def _full_tile():
            _accumulate()

        @pl.when(t == last)
        def _ragged_tile():
            _accumulate(lane_limit=t_valid - t * tt)
    else:
        _accumulate()

    @pl.when(t == last)
    def _finalize():
        sum_ref[...] = acc_ref[...]


def _fms_apply_kernel(x_ref, s_ref, o_ref):
    """Pass 2 (two-pass path): out = (x + 1) * s, lane-dense over time.
    Out-of-bounds lanes/rows of ragged edge blocks are dropped on store."""
    s = s_ref[...]                                        # (r_tile, 1) f32
    xf = x_ref[...].astype(jnp.float32)
    o_ref[...] = ((xf + 1.0) * s).astype(o_ref.dtype)


# ---------------------------------------------------------------------------
# Wrapper
# ---------------------------------------------------------------------------

def fms_block(x, weight, bias, *, block_target_bytes=None,
              vmem_limit_bytes=None, force_two_pass=False):
    """FMS block forward.

    x: (B, F, T); weight: (F, F) torch Linear weight ([out, in]); bias: (F,).
    Returns (B, F, T) with out = x * s + s, s = sigmoid(mean_T(x) @ W.T + b).
    """
    B, F, T = x.shape
    out_dtype = x.dtype
    R = B * F
    itemsize = x.dtype.itemsize

    vmem_limit = int(vmem_limit_bytes or _default_vmem_limit_bytes())
    block_target = int(block_target_bytes
                       or max(1 << 20, min(4 << 20, vmem_limit // 8)))

    # nn.Linear is mean @ W.T + b: transpose once, outside any kernel.
    w_t = jnp.transpose(weight).astype(jnp.float32)       # (F_in, F_out)
    b2d = bias.reshape(1, F).astype(jnp.float32)

    # ---- fused single-pass path: x read from HBM exactly once --------------
    slab = F * T
    fused_need = (4 * slab * itemsize          # double-buffered in + out blocks
                  + 3 * slab * 4               # in-kernel f32 temporaries
                  + 4 * F * F * 4)             # weight / bias double buffers
    if (not force_two_pass) and fused_need <= max(vmem_limit - (4 << 20), 0):
        return pl.pallas_call(
            functools.partial(_fms_fused_kernel, inv_t=1.0 / T),
            out_shape=jax.ShapeDtypeStruct((B, F, T), out_dtype),
            grid=(B,),
            in_specs=[
                pl.BlockSpec((1, F, T), lambda b: (b, 0, 0)),
                pl.BlockSpec((F, F), lambda b: (0, 0)),
                pl.BlockSpec((1, F), lambda b: (0, 0)),
            ],
            out_specs=pl.BlockSpec((1, F, T), lambda b: (b, 0, 0)),
            compiler_params=pltpu.CompilerParams(
                dimension_semantics=("parallel",),
                vmem_limit_bytes=vmem_limit),
        )(x, w_t, b2d)

    # ---- two-pass path: rows = B*F flattened, large lane-dense blocks ------
    x2d = x.reshape(R, T)                                  # free view reshape
    r_tile, tt = _choose_tiles(R, T, itemsize, block_target)
    n_r, n_t = pl.cdiv(R, r_tile), pl.cdiv(T, tt)

    # pass 1: per-row sums over time (no pad: ragged last tile masked inside).
    sums = pl.pallas_call(
        functools.partial(_fms_row_sum_kernel, tt=tt, t_valid=T,
                          need_mask=(T % tt != 0)),
        out_shape=jax.ShapeDtypeStruct((R, 1), jnp.float32),
        grid=(n_r, n_t),
        in_specs=[pl.BlockSpec((r_tile, tt), lambda r, t: (r, t))],
        out_specs=pl.BlockSpec((r_tile, 1), lambda r, t: (r, 0)),
        scratch_shapes=[pltpu.VMEM((r_tile, 1), jnp.float32)],
        compiler_params=pltpu.CompilerParams(
            dimension_semantics=("parallel", "arbitrary"),
            vmem_limit_bytes=vmem_limit),
    )(x2d)

    # mean -> linear -> sigmoid in plain JAX: O(B*F^2), negligible next to the
    # streaming passes; keeps the gridded kernels free of weight/bias buffers
    # and of a 1-row MXU matmul inside the pipelined loop.
    mean = sums.reshape(B, F) * (1.0 / T)
    s = jax.nn.sigmoid(mean @ w_t + b2d).reshape(R, 1)

    # pass 2: stream x once more, write (x + 1) * s lane-dense.
    out2d = pl.pallas_call(
        _fms_apply_kernel,
        out_shape=jax.ShapeDtypeStruct((R, T), out_dtype),
        grid=(n_r, n_t),
        in_specs=[
            pl.BlockSpec((r_tile, tt), lambda r, t: (r, t)),
            pl.BlockSpec((r_tile, 1), lambda r, t: (r, 0)),
        ],
        out_specs=pl.BlockSpec((r_tile, tt), lambda r, t: (r, t)),
        compiler_params=pltpu.CompilerParams(
            dimension_semantics=("parallel", "parallel"),
            vmem_limit_bytes=vmem_limit),
    )(x2d, s)

    return out2d.reshape(B, F, T)


def fms_block_ref(x, weight, bias):
    """Pure-JAX reference mirroring the PyTorch forward."""
    mean = jnp.mean(x.astype(jnp.float32), axis=-1)                # (B, F)
    z = mean @ weight.T.astype(jnp.float32) + bias.astype(jnp.float32)
    s = jax.nn.sigmoid(z)[:, :, None]                              # (B, F, 1)
    return (x.astype(jnp.float32) * s + s).astype(x.dtype)


if __name__ == "__main__":
    key = jax.random.PRNGKey(0)

    configs = [
        # fused single-pass path (whole batch slab easily fits in VMEM)
        dict(B=2, F=16, T=384, kwargs={}),
        # two-pass path: multiple row tiles + ragged time tiles (mask branch)
        dict(B=2, F=16, T=200,
             kwargs=dict(force_two_pass=True, block_target_bytes=4096)),
        # two-pass path: non-multiple-of-8 row count (B*F = 60), single tile
        dict(B=3, F=20, T=384, kwargs=dict(force_two_pass=True)),
    ]

    for cfg in configs:
        B, F, T = cfg["B"], cfg["F"], cfg["T"]
        key, kx, kw, kb = jax.random.split(key, 4)
        x = jax.random.normal(kx, (B, F, T), dtype=jnp.float32)
        # Synthetic nn.Linear(n_features, n_features) params: weight (out, in),
        # bias (out,).
        bound = 1.0 / (F ** 0.5)
        weight = jax.random.uniform(kw, (F, F), minval=-bound, maxval=bound,
                                    dtype=jnp.float32)
        bias = jax.random.uniform(kb, (F,), minval=-bound, maxval=bound,
                                  dtype=jnp.float32)

        fn = jax.jit(functools.partial(fms_block, **cfg["kwargs"]))
        out = jax.block_until_ready(fn(x, weight, bias))
        ref = fms_block_ref(x, weight, bias)
        assert out.shape == (B, F, T)
        assert jnp.allclose(out, ref, atol=1e-5, rtol=1e-5), \
            f"mismatch vs reference for config {cfg}"

    print("KERNEL_OK")
</pallas_src>

<mosaic_0001>
module attributes {stable_mosaic.version = 11 : i64} {
  func.func @_fms_fused_kernel(%arg0: i32, %arg1: memref<1x16x384xf32, #tpu.memory_space<vmem>>, %arg2: memref<16x16xf32, #tpu.memory_space<vmem>>, %arg3: memref<1x16xf32, #tpu.memory_space<vmem>>, %arg4: memref<1x16x384xf32, #tpu.memory_space<vmem>>) attributes {dimension_semantics = [#tpu.dimension_semantics<parallel>], iteration_bounds = array<i64: 2>, scalar_prefetch = 0 : i64, scratch_operands = 0 : i64, tpu.core_type = #tpu.core_type<tc>, window_params = [{transform_indices = @transform_0, window_bounds = array<i64: 1, 16, 384>}, {pipeline_mode = #tpu.pipeline_mode<synchronous>, transform_indices = @transform_1, window_bounds = array<i64: 16, 16>}, {pipeline_mode = #tpu.pipeline_mode<synchronous>, transform_indices = @transform_2, window_bounds = array<i64: 1, 16>}, {transform_indices = @transform_3, window_bounds = array<i64: 1, 16, 384>}]} {
    %c0 = arith.constant 0 : index
    %c0_0 = arith.constant 0 : index
    %c0_1 = arith.constant 0 : index
    %0 = vector.load %arg1[%c0, %c0_0, %c0_1] : memref<1x16x384xf32, #tpu.memory_space<vmem>>, vector<1x16x384xf32>
    %cst = arith.constant dense<0.000000e+00> : vector<1x16xf32>
    %1 = vector.multi_reduction <add>, %0, %cst [2] : vector<1x16x384xf32> to vector<1x16xf32>
    %cst_2 = arith.constant 0.00260416674 : f32
    %2 = vector.broadcast %cst_2 : f32 to vector<1x16xf32>
    %3 = arith.mulf %1, %2 : vector<1x16xf32>
    %c0_3 = arith.constant 0 : index
    %c0_4 = arith.constant 0 : index
    %4 = vector.load %arg2[%c0_3, %c0_4] : memref<16x16xf32, #tpu.memory_space<vmem>>, vector<16x16xf32>
    %cst_5 = arith.constant dense<0.000000e+00> : vector<1x16xf32>
    %5 = tpu.matmul %3, %4, %cst_5 {dimension_numbers = #tpu.dot_dimension_numbers<[1], [0], [0], [1], [0, 0, 1, 1], [], []>} : vector<1x16xf32>, vector<16x16xf32>, vector<1x16xf32> -> vector<1x16xf32>
    %c0_6 = arith.constant 0 : index
    %c0_7 = arith.constant 0 : index
    %6 = vector.load %arg3[%c0_6, %c0_7] : memref<1x16xf32, #tpu.memory_space<vmem>>, vector<1x16xf32>
    %7 = arith.addf %5, %6 : vector<1x16xf32>
    %8 = arith.negf %7 : vector<1x16xf32>
    %9 = math.exp %8 : vector<1x16xf32>
    %cst_8 = arith.constant 1.000000e+00 : f32
    %10 = vector.broadcast %cst_8 : f32 to vector<1x16xf32>
    %11 = arith.addf %10, %9 : vector<1x16xf32>
    %12 = arith.divf %10, %11 : vector<1x16xf32>
    %13 = vector.shape_cast %12 : vector<1x16xf32> to vector<1x16x1xf32>
    %cst_9 = arith.constant 1.000000e+00 : f32
    %14 = vector.broadcast %cst_9 : f32 to vector<1x16x384xf32>
    %15 = arith.addf %0, %14 : vector<1x16x384xf32>
    %16 = vector.broadcast %13 : vector<1x16x1xf32> to vector<1x16x384xf32>
    %17 = arith.mulf %15, %16 : vector<1x16x384xf32>
    %c0_10 = arith.constant 0 : index
    %c0_11 = arith.constant 0 : index
    %c0_12 = arith.constant 0 : index
    %18 = vector.load %arg4[%c0_10, %c0_11, %c0_12] : memref<1x16x384xf32, #tpu.memory_space<vmem>>, vector<1x16x384xf32>
    tpu.vector_store %arg4[%c0_10, %c0_11, %c0_12], %17 {strides = array<i32>} : memref<1x16x384xf32, #tpu.memory_space<vmem>>, vector<1x16x384xf32>,
    return
  }
  func.func @transform_0(%arg0: i32) -> (i32, i32, i32) {
    %c0_i32 = arith.constant 0 : i32
    %c0_i32_0 = arith.constant 0 : i32
    %c0_i32_1 = arith.constant 0 : i32
    return %arg0, %c0_i32, %c0_i32_0 : i32, i32, i32
  }
  func.func @transform_1(%arg0: i32) -> (i32, i32) {
    %c0_i32 = arith.constant 0 : i32
    %c0_i32_0 = arith.constant 0 : i32
    %c0_i32_1 = arith.constant 0 : i32
    return %c0_i32, %c0_i32_0 : i32, i32
  }
  func.func @transform_2(%arg0: i32) -> (i32, i32) {
    %c0_i32 = arith.constant 0 : i32
    %c0_i32_0 = arith.constant 0 : i32
    %c0_i32_1 = arith.constant 0 : i32
    return %c0_i32, %c0_i32_0 : i32, i32
  }
  func.func @transform_3(%arg0: i32) -> (i32, i32, i32) {
    %c0_i32 = arith.constant 0 : i32
    %c0_i32_0 = arith.constant 0 : i32
    %c0_i32_1 = arith.constant 0 : i32
    return %arg0, %c0_i32, %c0_i32_0 : i32, i32, i32
  }
}

</mosaic_0001>

<llo_original>
// kernel: fms_block.1
$region0: #{fms_block.1}
  #allocation0 [shape = 'u32[]', space=smem, size = 0x4, offset = 0x4, fixed_abs, tag = 'smem constant byte address 0x4 - core index']
  #allocation1 [shape = 'u32[72,128]{1,0:T(1,128)}', space=vmem, size = 0x9000, scoped, tag = 'internal scratch']
  %s0 = inlined_call_operand.hbm [shape: f32[2,16,384], index: 0, kind: input, shape index: {}]
  %s1 = inlined_call_operand.vmem [shape: f32[16,16], index: 1, kind: input, shape index: {}]
  %s2 = inlined_call_operand.vmem [shape: f32[1,16], index: 2, kind: input, shape index: {}]
  %s3 = inlined_call_operand.hbm [shape: f32[2,16,384], index: 3, kind: output, shape index: {}]
  %s4 = sld [smem:[#allocation0]]
  $region49: #{fms_block.1} parent=0
    _
  %s6 = ssub.s32 1, %s4
  %s7 = scalar_select 0, %s6, %s4
  $region1: #{fms_block.1} parent=0
    #allocation2 [shape = 'u8[49152]{0}', space=vmem, size = 0xc000, scoped, tag = 'input window, operand 0']
    #allocation3 [shape = 's32[2]{0}', space=sflag, size = 0x8, scoped, tag = 'scoped memory for fms_block.1']
    #allocation4 [shape = 's32[2]{0}', space=sflag, size = 0x8, scoped, tag = 'scoped memory for fms_block.1']
    #allocation5 [shape = 'u8[49152]{0}', space=vmem, size = 0xc000, scoped, tag = 'output window, operand 0']
    %8 = vsyncpa [#allocation3], 0
    %s9 = scalar_lea.sflag [#allocation3], 1
    %10 = vsyncpa %s9, 0
    %11 = vsyncpa [#allocation4], 0
    %s12 = scalar_lea.sflag [#allocation4], 1
    %13 = vsyncpa %s12, 0
    loop: start=0, step=1, limit=4
    $region2: #{fms_block.1} parent=1 // loop_pre_header
      _
    $region3: #{fms_block.1} parent=1 // loop_header
      %s15 = sphi 0, %s19
      %p16 = scmp.ge.s32.totalorder %s15, 4
      %s25 = sphi 0, %s27
      %s28 = sphi 0, %s25
      %s29 = sphi 0, %s28
      %s45 = sphi 0, %s29
      %s49 = sphi 0, %s49
      %s51 = sphi 0, %s49
      %s52 = sphi 0, %s51
      %s66 = sphi 0, %s52
      %s70 = sphi 0, %s70
      %s72 = sphi 0, %s70
      %s73 = sphi 0, %s72
      %s87 = sphi 0, %s73
      %s93 = sphi 0, %s95
      %s96 = sphi 0, %s93
      %s97 = sphi 0, %s96
      %s113 = sphi 0, %s97
    $region4: #{fms_block.1} parent=1 // loop_header_branch
      %18 = sbr.rel (%p16) target = $region8
    $region5: #{fms_block.1} parent=1 // loop_body
      %s20 = ssub.s32 %s15, 1
      %s21 = ssub.s32 %s15, 2
      %s22 = sadd.s32 %s15, 1
      %s23 = ssub.s32 %s15, %s22
      %p24 = scmp.eq.s32.totalorder %s23, 0
      %s26 = sadd.s32 %s25, 1
      %s27 = scalar_select %p24, %s25, %s26
      %p30 = pneg %p24
      %p31 = scmp.eq.s32.totalorder %s15, 1
      %p32 = por %p30, %p31
      %p33 = scmp.ne.s32.totalorder %s25, %s28
      %p34 = scmp.eq.s32.totalorder %s15, 0
      %p35 = por %p33, %p34
      %p36 = scmp.ne.s32.totalorder %s25, %s28
      %p37 = scmp.eq.s32.totalorder %s20, 1
      %p38 = por %p36, %p37
      %p39 = scmp.ne.s32.totalorder %s28, %s29
      %p40 = scmp.eq.s32.totalorder %s20, 0
      %p41 = por %p39, %p40
      %p42 = scmp.ne.s32.totalorder %s28, %s29
      %p43 = scmp.eq.s32.totalorder %s21, 1
      %p44 = por %p42, %p43
      %p46 = scmp.ne.s32.totalorder %s29, %s45
      %p47 = scmp.eq.s32.totalorder %s21, 0
      %p48 = por %p46, %p47
      %s50 = sadd.s32 %s49, 1
      %p53 = scmp.eq.s32.totalorder %s15, 1
      %p54 = scmp.ne.s32.totalorder %s49, %s51
      %p55 = scmp.eq.s32.totalorder %s15, 0
      %p56 = por %p54, %p55
      %p57 = scmp.ne.s32.totalorder %s49, %s51
      %p58 = scmp.eq.s32.totalorder %s20, 1
      %p59 = por %p57, %p58
      %p60 = scmp.ne.s32.totalorder %s51, %s52
      %p61 = scmp.eq.s32.totalorder %s20, 0
      %p62 = por %p60, %p61
      %p63 = scmp.ne.s32.totalorder %s51, %s52
      %p64 = scmp.eq.s32.totalorder %s21, 1
      %p65 = por %p63, %p64
      %p67 = scmp.ne.s32.totalorder %s52, %s66
      %p68 = scmp.eq.s32.totalorder %s21, 0
      %p69 = por %p67, %p68
      %s71 = sadd.s32 %s70, 1
      %p74 = scmp.eq.s32.totalorder %s15, 1
      %p75 = scmp.ne.s32.totalorder %s70, %s72
      %p76 = scmp.eq.s32.totalorder %s15, 0
      %p77 = por %p75, %p76
      %p78 = scmp.ne.s32.totalorder %s70, %s72
      %p79 = scmp.eq.s32.totalorder %s20, 1
      %p80 = por %p78, %p79
      %p81 = scmp.ne.s32.totalorder %s72, %s73
      %p82 = scmp.eq.s32.totalorder %s20, 0
      %p83 = por %p81, %p82
      %p84 = scmp.ne.s32.totalorder %s72, %s73
      %p85 = scmp.eq.s32.totalorder %s21, 1
      %p86 = por %p84, %p85
      %p88 = scmp.ne.s32.totalorder %s73, %s87
      %p89 = scmp.eq.s32.totalorder %s21, 0
      %p90 = por %p88, %p89
      %s91 = ssub.s32 %s15, %s22
      %p92 = scmp.eq.s32.totalorder %s91, 0
      %s94 = sadd.s32 %s93, 1
      %s95 = scalar_select %p92, %s93, %s94
      %p98 = pneg %p92
      %p99 = scmp.eq.s32.totalorder %s15, 1
      %p100 = por %p98, %p99
      %p101 = scmp.ne.s32.totalorder %s93, %s96
      %p102 = scmp.eq.s32.totalorder %s15, 0
      %p103 = por %p101, %p102
      %p104 = scmp.ne.s32.totalorder %s93, %s96
      %p105 = scmp.eq.s32.totalorder %s20, 1
      %p106 = por %p104, %p105
      %p107 = scmp.ne.s32.totalorder %s96, %s97
      %p108 = scmp.eq.s32.totalorder %s20, 0
      %p109 = por %p107, %p108
      %p110 = scmp.ne.s32.totalorder %s96, %s97
      %p111 = scmp.eq.s32.totalorder %s21, 1
      %p112 = por %p110, %p111
      %p114 = scmp.ne.s32.totalorder %s97, %s113
      %p115 = scmp.eq.s32.totalorder %s21, 0
      %p116 = por %p114, %p115
      %p117 = scmp.le.s32.totalorder 1, %s15
      %p118 = scmp.lt.s32.totalorder %s15, 3
      %p119 = pnand %p117, %p118
      %p120 = pneg %p119
      // Predicated region
      $region9: #{fms_block.1} parent=5 // pred_check
        _
      $region10: #{fms_block.1} parent=5 // pred_check_branch
        %122 = sbr.rel (%p119) target = $region12
      $region11: #{fms_block.1} parent=5 // pred_region
        %s123 = ssub.s32 %s15, 1
        // Predicated region
        $region13: #{fms_block.1} parent=11 // pred_check
          %p124 = pneg %p62
        $region14: #{fms_block.1} parent=11 // pred_check_branch
          %126 = sbr.rel (%p124) target = $region16
        $region15: #{fms_block.1} parent=11 // pred_region
          _
        $region16: #{fms_block.1} parent=11 // pred_fallthru
          _
        // Predicated region
        $region17: #{fms_block.1} parent=11 // pred_check
          %p127 = pneg %p83
        $region18: #{fms_block.1} parent=11 // pred_check_branch
          %129 = sbr.rel (%p127) target = $region20
        $region19: #{fms_block.1} parent=11 // pred_region
          _
        $region20: #{fms_block.1} parent=11 // pred_fallthru
          _
      $region12: #{fms_block.1} parent=5 // pred_fallthru
        _
      %p130 = scmp.lt.s32.totalorder %s15, 2
      // Predicated region
      $region21: #{fms_block.1} parent=5 // pred_check
        %p131 = pneg %p130
      $region22: #{fms_block.1} parent=5 // pred_check_branch
        %133 = sbr.rel (%p131) target = $region24
      $region23: #{fms_block.1} parent=5 // pred_region
        // Predicated region
        $region25: #{fms_block.1} parent=23 // pred_check
          %p134 = pneg %p35
        $region26: #{fms_block.1} parent=23 // pred_check_branch
          %136 = sbr.rel (%p134) target = $region28
        $region27: #{fms_block.1} parent=23 // pred_region
          %s137 = sand.u32 %s25, 1
          %s138 = scalar_lea.sflag [#allocation3], %s137
          %s139 = sand.u32 %s25, 1
          %s140 = smul.addr %s139, 48
          %s141 = scalar_lea.vmem [#allocation2], %s140
          %143 = vsyncadd %s138, 0
          %s144 = smul.addr %s15, 6
          %s145 = smul.addr %s144, 8
          %s146 = scalar_lea.hbm %s0, %s145
          %s147 = sshll.u32 %s146, 4
          %s148 = int_to_ptr.hbm [resolvable:$true] %s147
          %s149 = sshll.u32 %s141, 4
          %s150 = int_to_ptr.vmem [resolvable:$true] %s149
          %155 = dma.hbm_to_vmem [thread:$0]  %s148, 768, %s150, %s138, 384, 384, 24
        $region28: #{fms_block.1} parent=23 // pred_fallthru
          _
      $region24: #{fms_block.1} parent=5 // pred_fallthru
        _
      %p156 = scmp.le.s32.totalorder 1, %s15
      %p157 = scmp.lt.s32.totalorder %s15, 3
      %p158 = pnand %p156, %p157
      %p159 = pneg %p158
      // Predicated region
      $region29: #{fms_block.1} parent=5 // pred_check
        _
      $region30: #{fms_block.1} parent=5 // pred_check_branch
        %161 = sbr.rel (%p158) target = $region32
      $region31: #{fms_block.1} parent=5 // pred_region
        %s162 = ssub.s32 %s15, 1
        %s163 = sand.u32 %s28, 1
        %s164 = scalar_lea.sflag [#allocation3], %s163
        %s165 = sand.u32 %s28, 1
        %s166 = smul.addr %s165, 48
        %s167 = scalar_lea.vmem [#allocation2], %s166
        // Predicated region
        $region33: #{fms_block.1} parent=31 // pred_check
          %p168 = pneg %p41
        $region34: #{fms_block.1} parent=31 // pred_check_branch
          %170 = sbr.rel (%p168) target = $region36
        $region35: #{fms_block.1} parent=31 // pred_region
          %172 = dma.done %s164, 768
        $region36: #{fms_block.1} parent=31 // pred_fallthru
          _
        %s173 = sand.u32 %s28, 1
        %s174 = scalar_lea.sflag [#allocation3], %s173
        %s175 = sand.u32 %s28, 1
        %s176 = smul.addr %s175, 48
        %s177 = scalar_lea.vmem [#allocation2], %s176
        %p178 = pneg %p41
        %p179 = pneg %p38
        %p180 = pneg %p62
        %p181 = pneg %p59
        %p182 = pneg %p83
        %p183 = pneg %p80
        %p184 = pneg %p109
        %p185 = pneg %p106
        %s186 = sand.u32 %s96, 1
        %s187 = scalar_lea.sflag [#allocation4], %s186
        %s188 = sand.u32 %s96, 1
        %s189 = smul.addr %s188, 48
        %s190 = scalar_lea.vmem [#allocation5], %s189
        %v191 = vld [vmem:[%s167] sm:$0xff]
        %v192 = vld [vmem:[%s167 + $0x8] sm:$0xff]
        %v193 = vld [vmem:[%s167 + $0x10] sm:$0xff]
        %v194 = vld [vmem:[%s167 + $0x18] sm:$0xff]
        %v195 = vld [vmem:[%s167 + $0x20] sm:$0xff]
        %v196 = vld [vmem:[%s167 + $0x28] sm:$0xff]
        %v197 = vadd.f32 %v191, %v192
        %v198 = vadd.f32 %v197, %v193
        %199 = vadd.xlane.f32.xlu0 %v198
        %v200 = vpop.xlane.xlu0 %199
        %v201 = vadd.f32 %v194, %v195
        %v202 = vadd.f32 %v201, %v196
        %203 = vadd.xlane.f32.xlu0 %v202
        %v204 = vpop.xlane.xlu0 %203
        %v205 = vmul.f32 %v200, 0.0026041667
        %v206 = vmul.f32 %v204, 0.0026041667
        %v207 = vld [vmem:[%s1] sm:$0xff]
        %v208 = vld [vmem:[%s1 + $0x8] sm:$0xff]
        %v209 = vld [vmem:[%s2] sm:$0x1]
        %v212 = vlaneseq
        %v213 = vand.u32 %v212, 127
        %v214 = vperm.slane %v205, %v213
        %v215 = vadd.s32 %v213, 4294967288
        %v216 = vperm.slane %v206, %v215
        %vm217 = vcmask 130112
        %v218 = vsel %vm217, %v216, %v214
        %vm219 = vcmask 130048
        %v220 = vsel %vm219, %v218, 0
        %222 = vmatpush.msra.mxu0 0.0
        %223 = vmatpush.msra.mxu0 0.0
        %224 = vmatpush.msra.mxu0 0.0
        %225 = vmatpush.msra.mxu0 0.0
        %226 = vmatpush.msra.mxu0 0.0
        %227 = vmatpush.msra.mxu0 0.0
        %228 = vmatpush.msra.mxu0 0.0
        %229 = vmatpush.msra.mxu0 0.0
        %230 = vmatpush.msra.mxu0 0.0
        %231 = vmatpush.msra.mxu0 0.0
        %232 = vmatpush.msra.mxu0 0.0
        %233 = vmatpush.msra.mxu0 0.0
        %234 = vmatpush.msra.mxu0 0.0
        %235 = vmatpush.msra.mxu0 0.0
        %236 = vmatpush.msra.mxu0 %v208
        %237 = vmatpush.msra.mxu0 %v207
        %238 = vmatmul.f32.gmra.mxu0 %v220
        %v239 = vpop.f32.mrf.mxu0
        %v240 = vadd.f32 %v209, %v239
        %241 = vdwg.mxu0
        %v242 = vxor.u32 %v240, 2147483648
        %v243 = vmul.f32 %v242, 1.442695
        %v244 = vpow.pop %v243
        %v245 = vadd.f32 %v244, 1.0
        %v246 = vrcp.pop %v245
        %v247 = vmul.f32 %v245, %v246
        %v248 = vsub.f32 1.0, %v247
        %v249 = vmul.f32 %v246, %v248
        %v250 = vadd.f32 %v246, %v249
        %vm251 = vweird.f32 %v245
        %vm252 = vweird.f32 %v246
        %vm253 = vmor %vm251, %vm252
        %v254 = vsel %vm253, %v246, %v250
        %v255 = vand.u32 2147483647, %v245
        %vm256 = vcmp.eq.f32.partialorder %v255, 8.507059e+37
        %v257 = vand.u32 %v245, 2147483648
        %v258 = vor.u32 1.1754944e-38, %v257
        %v259 = vsel %vm256, %v258, %v254
        %v260 = vmul.f32 1.0, %v259
        %v261 = vperm.slane %v260, 0
        %v262 = vlaneseq
        %v263 = vshrl.u32 %v262, 7
        %265 = vset.pattern.permute.xlu0 %v263
        %266 = vperm.xlu0 %265, %v261
        %v267 = vpop.permute.xlu0 %266
        %v268 = vlaneseq
        %v269 = vshrl.u32 %v268, 7
        %v270 = vadd.s32 %v269, 8
        %271 = vset.pattern.permute.xlu0 %v270
        %272 = vperm.xlu0 %271, %v261
        %v273 = vpop.permute.xlu0 %272
        %v274 = vadd.f32 %v191, 1.0
        %v275 = vadd.f32 %v192, 1.0
        %v276 = vadd.f32 %v193, 1.0
        %v277 = vadd.f32 %v194, 1.0
        %v278 = vadd.f32 %v195, 1.0
        %v279 = vadd.f32 %v196, 1.0
        %v280 = vmul.f32 %v274, %v267
        %v281 = vmul.f32 %v275, %v267
        %v282 = vmul.f32 %v276, %v267
        %v283 = vmul.f32 %v277, %v273
        %v284 = vmul.f32 %v278, %v273
        %v285 = vmul.f32 %v279, %v273
        %286 = vst [vmem:[%s190] sm:$0xff] %v280
        %287 = vst [vmem:[%s190 + $0x8] sm:$0xff] %v281
        %288 = vst [vmem:[%s190 + $0x10] sm:$0xff] %v282
        %289 = vst [vmem:[%s190 + $0x18] sm:$0xff] %v283
        %290 = vst [vmem:[%s190 + $0x20] sm:$0xff] %v284
        %291 = vst [vmem:[%s190 + $0x28] sm:$0xff] %v285
        %s292 = sand.u32 %s96, 1
        %s293 = scalar_lea.sflag [#allocation4], %s292
        %s294 = sand.u32 %s96, 1
        %s295 = smul.addr %s294, 48
        %s296 = scalar_lea.vmem [#allocation5], %s295
        // Predicated region
        $region37: #{fms_block.1} parent=31 // pred_check
          %p297 = pneg %p106
        $region38: #{fms_block.1} parent=31 // pred_check_branch
          %299 = sbr.rel (%p297) target = $region40
        $region39: #{fms_block.1} parent=31 // pred_region
          %301 = vsyncadd %s293, 0
          %s302 = smul.addr %s20, 6
          %s303 = smul.addr %s302, 8
          %s304 = scalar_lea.hbm %s3, %s303
          %s305 = sshll.u32 %s296, 4
          %s306 = int_to_ptr.vmem [resolvable:$true] %s305
          %s307 = sshll.u32 %s304, 4
          %s308 = int_to_ptr.hbm [resolvable:$true] %s307
          %313 = dma.vmem_to_hbm [thread:$0]  %s306, 768, %s308, %s293, 384, 384, 24
        $region40: #{fms_block.1} parent=31 // pred_fallthru
          _
      $region32: #{fms_block.1} parent=5 // pred_fallthru
        _
      %p314 = scmp.le.s32.totalorder 2, %s15
      // Predicated region
      $region41: #{fms_block.1} parent=5 // pred_check
        %p315 = pneg %p314
      $region42: #{fms_block.1} parent=5 // pred_check_branch
        %317 = sbr.rel (%p315) target = $region44
      $region43: #{fms_block.1} parent=5 // pred_region
        %s318 = ssub.s32 %s15, 2
        // Predicated region
        $region45: #{fms_block.1} parent=43 // pred_check
          %p319 = pneg %p112
        $region46: #{fms_block.1} parent=43 // pred_check_branch
          %321 = sbr.rel (%p319) target = $region48
        $region47: #{fms_block.1} parent=43 // pred_region
          %s322 = sand.u32 %s97, 1
          %s323 = scalar_lea.sflag [#allocation4], %s322
          %s324 = sand.u32 %s97, 1
          %s325 = smul.addr %s324, 48
          %s326 = scalar_lea.vmem [#allocation5], %s325
          %328 = dma.done %s323, 768
        $region48: #{fms_block.1} parent=43 // pred_fallthru
          _
      $region44: #{fms_block.1} parent=5 // pred_fallthru
        _
    $region6: #{fms_block.1} parent=1 // loop_footer
      %s19 = sadd.s32 1, %s15
    $region7: #{fms_block.1} parent=1 // loop_footer_branch
      %14 = sbr.rel target = $region3
    $region8: #{fms_block.1} parent=1 // loop_exit
      _
    %329 = vsyncpa [#allocation3], 1
    %s330 = scalar_lea.sflag [#allocation3], 1
    %331 = vsyncpa %s330, 1
    %332 = vsyncpa [#allocation4], 1
    %s333 = scalar_lea.sflag [#allocation4], 1
    %334 = vsyncpa %s333, 1

</llo_original>
